<compile_context>
chip_gen: v7x
topology: tpu7x:2x2x1
jax: 0.10.0
libtpu: 0.0.40
codegen_flags: <defaults>
</compile_context>

<pallas_src>
import jax
import jax.numpy as jnp
from jax.experimental import pallas as pl
from jax.experimental.pallas import tpu as pltpu

INPUT_DIM = 59
HIDDEN_DIM = 32
LATENT_DIM = 16
# TODO(synk): `num_speakers` is undefined in the reference snippet; fixed to 4.
NUM_SPEAKERS = 4

G = 64                 # 64-lane packing group (half an f32 vreg lane span)
PACK_W = 3 * G         # packed input : [x|0] [eps_z|label|0] [eps_x|0]
ZH_W = 3 * G           # latent head  : [mu|0] [logvar|0] [mu|logvar|0]
XH_W = 2 * G           # output head  : [x_mu|0] [x_logvar|0]
OUT_W = 4 * G          # output slab  : [x_mu|0|x_logvar|0] [x_samp|0] [mu|logvar|0]


def _round_up(n, m):
    return ((n + m - 1) // m) * m


# --------------------------------------------------------------------------- #
# Kernel
# --------------------------------------------------------------------------- #
def vae_mlp_kernel(
    packed_ref,                      # (tile_b, 192) packed activations+noise
    w_enc_ref, b_enc_ref,            # encoder (input rows zero-padded to 64)
    w_zh_ref, b_zh_ref,              # fused latent head, 192 wide
    w_dec_ref, b_dec_ref,            # decoder, rows 0:16 act on z, 16:20 on label
    w_xh_ref, b_xh_ref,              # fused output head, 128 wide
    out_ref,                         # (tile_b, 256) lane-dense output slab
):
    xg = packed_ref[:, 0 * G:1 * G]      # x(0:59)     | zeros
    ezl = packed_ref[:, 1 * G:2 * G]     # eps_z(0:16) | label(16:20) | zeros
    exg = packed_ref[:, 2 * G:3 * G]     # eps_x(0:59) | zeros

    # ---- encode: h = tanh(fc_enc(x)); padded x lanes hit zero weight rows ----
    h = jnp.tanh(
        jnp.dot(xg, w_enc_ref[...], preferred_element_type=jnp.float32)
        + b_enc_ref[...]
    )

    # ---- fused latent head: [mu|0][logvar|0][mu|logvar|0] ----
    zh = jnp.dot(h, w_zh_ref[...], preferred_element_type=jnp.float32) + b_zh_ref[...]
    mu_g = zh[:, 0 * G:1 * G]
    lv_g = zh[:, 1 * G:2 * G]

    # z = mu + exp(0.5*logvar)*eps.  Padded mu/logvar lanes are exactly 0, so
    # lanes 16:20 become 0 + exp(0)*label = label -> zc == [z | label | 0].
    zc = mu_g + jnp.exp(0.5 * lv_g) * ezl

    # ---- decode: single matmul against padded W_dec == cat(z, label) @ W ----
    h2 = jnp.tanh(
        jnp.dot(zc, w_dec_ref[...], preferred_element_type=jnp.float32)
        + b_dec_ref[...]
    )

    # ---- fused output head: [x_mu(0:59)|0 | x_logvar(64:123)|0] ----
    xh = jnp.dot(h2, w_xh_ref[...], preferred_element_type=jnp.float32) + b_xh_ref[...]
    x_samp = xh[:, 0 * G:1 * G] + jnp.exp(0.5 * xh[:, 1 * G:2 * G]) * exg

    # ---- lane-dense 256-wide output slab ----
    out_ref[:, 0 * G:2 * G] = xh                    # x_mu | x_logvar (128 aligned)
    out_ref[:, 2 * G:3 * G] = x_samp                # x sample
    out_ref[:, 3 * G:4 * G] = zh[:, 2 * G:3 * G]    # mu | logvar (head copy)


# --------------------------------------------------------------------------- #
# Parameter init (PyTorch Linear layout) and kernel-side packing
# --------------------------------------------------------------------------- #
def init_params(key):
    """PyTorch-Linear-style init; weights stored (in_features, out_features)."""
    def linear(k, fan_in, fan_out):
        kw, kb = jax.random.split(k)
        bound = 1.0 / jnp.sqrt(fan_in)
        w = jax.random.uniform(kw, (fan_in, fan_out), jnp.float32, -bound, bound)
        b = jax.random.uniform(kb, (1, fan_out), jnp.float32, -bound, bound)
        return w, b

    keys = jax.random.split(key, 6)
    w_enc, b_enc = linear(keys[0], INPUT_DIM, HIDDEN_DIM)
    w_mu, b_mu = linear(keys[1], HIDDEN_DIM, LATENT_DIM)
    w_lv, b_lv = linear(keys[2], HIDDEN_DIM, LATENT_DIM)
    w_dec, b_dec = linear(keys[3], LATENT_DIM + NUM_SPEAKERS, HIDDEN_DIM)
    w_xmu, b_xmu = linear(keys[4], HIDDEN_DIM, INPUT_DIM)
    w_xlv, b_xlv = linear(keys[5], HIDDEN_DIM, INPUT_DIM)
    return dict(
        w_enc=w_enc, b_enc=b_enc,
        w_mu=w_mu, b_mu=b_mu, w_lv=w_lv, b_lv=b_lv,
        w_dec=w_dec, b_dec=b_dec,
        w_xmu=w_xmu, b_xmu=b_xmu, w_xlv=w_xlv, b_xlv=b_xlv,
    )


def pack_params(p):
    """Fuse/zero-pad weights once, outside the kernel."""
    f32 = jnp.float32

    # Encoder: zero-pad input rows 59:64.
    w_enc = jnp.zeros((G, HIDDEN_DIM), f32).at[:INPUT_DIM].set(p["w_enc"])
    b_enc = p["b_enc"]

    # Latent head (192 wide): [mu|0][logvar|0][mu|logvar|0] (copies for output).
    w_zh = jnp.zeros((HIDDEN_DIM, ZH_W), f32)
    w_zh = w_zh.at[:, 0:LATENT_DIM].set(p["w_mu"])
    w_zh = w_zh.at[:, G:G + LATENT_DIM].set(p["w_lv"])
    w_zh = w_zh.at[:, 2 * G:2 * G + LATENT_DIM].set(p["w_mu"])
    w_zh = w_zh.at[:, 2 * G + LATENT_DIM:2 * G + 2 * LATENT_DIM].set(p["w_lv"])
    b_zh = jnp.zeros((1, ZH_W), f32)
    b_zh = b_zh.at[:, 0:LATENT_DIM].set(p["b_mu"])
    b_zh = b_zh.at[:, G:G + LATENT_DIM].set(p["b_lv"])
    b_zh = b_zh.at[:, 2 * G:2 * G + LATENT_DIM].set(p["b_mu"])
    b_zh = b_zh.at[:, 2 * G + LATENT_DIM:2 * G + 2 * LATENT_DIM].set(p["b_lv"])

    # Decoder: rows 0:16 act on z, rows 16:20 on the label, rest zero.
    w_dec = jnp.zeros((G, HIDDEN_DIM), f32)
    w_dec = w_dec.at[0:LATENT_DIM + NUM_SPEAKERS].set(p["w_dec"])
    b_dec = p["b_dec"]

    # Output head (128 wide): [x_mu(0:59)|0 | x_logvar(64:123)|0].
    w_xh = jnp.zeros((HIDDEN_DIM, XH_W), f32)
    w_xh = w_xh.at[:, 0:INPUT_DIM].set(p["w_xmu"])
    w_xh = w_xh.at[:, G:G + INPUT_DIM].set(p["w_xlv"])
    b_xh = jnp.zeros((1, XH_W), f32)
    b_xh = b_xh.at[:, 0:INPUT_DIM].set(p["b_xmu"])
    b_xh = b_xh.at[:, G:G + INPUT_DIM].set(p["b_xlv"])

    return dict(
        w_enc=w_enc, b_enc=b_enc,
        w_zh=w_zh, b_zh=b_zh,
        w_dec=w_dec, b_dec=b_dec,
        w_xh=w_xh, b_xh=b_xh,
    )


# --------------------------------------------------------------------------- #
# Wrapper
# --------------------------------------------------------------------------- #
def vae_mlp_forward(packed, x, label, eps_z, eps_x):
    x = x.reshape(-1, INPUT_DIM).astype(jnp.float32)
    batch = x.shape[0]
    label = label.reshape(batch, -1).astype(jnp.float32)
    eps_z = eps_z.reshape(batch, LATENT_DIM).astype(jnp.float32)
    eps_x = eps_x.reshape(batch, INPUT_DIM).astype(jnp.float32)

    # One packed input stream: [x|0][eps_z|label|0][eps_x|0] (3 x 64 lanes).
    def grp(a, width=G):
        return jnp.pad(a, ((0, 0), (0, width - a.shape[1])))
    packed_in = jnp.concatenate(
        [grp(x), grp(jnp.concatenate([eps_z, label], axis=1)), grp(eps_x)], axis=1)

    # >=2 grid steps when possible (both v7x TensorCores via "parallel"),
    # tile_b a multiple of 8, capped at 1024 (safe for v5e's 16 MiB scoped VMEM).
    tile_b = min(1024, _round_up(max(pl.cdiv(batch, 2), 1), 8))
    b_pad = _round_up(batch, tile_b)
    if b_pad != batch:
        packed_in = jnp.pad(packed_in, ((0, b_pad - batch), (0, 0)))
    grid = (b_pad // tile_b,)

    def row_map(i):        # batch-tiled activations / outputs
        return (i, 0)

    def const_map(i):      # resident weights / biases
        return (0, 0)

    def wspec(shape):
        return pl.BlockSpec(shape, const_map)

    flops_per_row = 2 * (
        G * HIDDEN_DIM          # encode
        + HIDDEN_DIM * ZH_W     # latent head
        + G * HIDDEN_DIM        # decode
        + HIDDEN_DIM * XH_W     # output head
    )
    cost = pl.CostEstimate(
        flops=b_pad * flops_per_row,
        transcendentals=b_pad * (2 * HIDDEN_DIM + 2 * G),
        bytes_accessed=4 * b_pad * (PACK_W + OUT_W),
    )

    slab = pl.pallas_call(
        vae_mlp_kernel,
        grid=grid,
        in_specs=[
            pl.BlockSpec((tile_b, PACK_W), row_map),   # packed activations
            wspec((G, HIDDEN_DIM)),                    # w_enc
            wspec((1, HIDDEN_DIM)),                    # b_enc
            wspec((HIDDEN_DIM, ZH_W)),                 # w_zh
            wspec((1, ZH_W)),                          # b_zh
            wspec((G, HIDDEN_DIM)),                    # w_dec
            wspec((1, HIDDEN_DIM)),                    # b_dec
            wspec((HIDDEN_DIM, XH_W)),                 # w_xh
            wspec((1, XH_W)),                          # b_xh
        ],
        out_specs=pl.BlockSpec((tile_b, OUT_W), row_map),
        out_shape=jax.ShapeDtypeStruct((b_pad, OUT_W), jnp.float32),
        compiler_params=pltpu.CompilerParams(dimension_semantics=("parallel",)),
        cost_estimate=cost,
    )(
        packed_in,
        packed["w_enc"], packed["b_enc"],
        packed["w_zh"], packed["b_zh"],
        packed["w_dec"], packed["b_dec"],
        packed["w_xh"], packed["b_xh"],
    )

    x_mu = slab[:batch, 0:INPUT_DIM]
    x_logvar = slab[:batch, G:G + INPUT_DIM]
    x_samp = slab[:batch, 2 * G:2 * G + INPUT_DIM]
    mu = slab[:batch, 3 * G:3 * G + LATENT_DIM]
    logvar = slab[:batch, 3 * G + LATENT_DIM:3 * G + 2 * LATENT_DIM]
    return [x_mu, x_logvar], x_samp, mu, logvar


def _reference_forward(p, x, label, eps_z, eps_x):
    """Pure-JAX reference for the full forward (same eps as the kernel)."""
    h = jnp.tanh(x @ p["w_enc"] + p["b_enc"])
    mu = h @ p["w_mu"] + p["b_mu"]
    logvar = h @ p["w_lv"] + p["b_lv"]
    z = mu + jnp.exp(0.5 * logvar) * eps_z
    zc = jnp.concatenate([z, label], axis=1)
    h2 = jnp.tanh(zc @ p["w_dec"] + p["b_dec"])
    x_mu = h2 @ p["w_xmu"] + p["b_xmu"]
    x_logvar = h2 @ p["w_xlv"] + p["b_xlv"]
    x_samp = x_mu + jnp.exp(0.5 * x_logvar) * eps_x
    return x_mu, x_logvar, x_samp, mu, logvar


if __name__ == "__main__":
    key = jax.random.PRNGKey(0)
    k_params, k_x, k_label, k_ez, k_ex = jax.random.split(key, 5)

    params = init_params(k_params)
    packed = pack_params(params)

    B = 8
    x = jax.random.normal(k_x, (B, INPUT_DIM), jnp.float32)
    speaker_ids = jax.random.randint(k_label, (B,), 0, NUM_SPEAKERS)
    label = jax.nn.one_hot(speaker_ids, NUM_SPEAKERS, dtype=jnp.float32)
    # TODO(synk): eps from jax.random.normal, not bitwise-identical to torch.randn.
    eps_z = jax.random.normal(k_ez, (B, LATENT_DIM), jnp.float32)
    eps_x = jax.random.normal(k_ex, (B, INPUT_DIM), jnp.float32)

    px, x_samp, mu, logvar = vae_mlp_forward(packed, x, label, eps_z, eps_x)
    jax.block_until_ready((px, x_samp, mu, logvar))

    assert px[0].shape == (B, INPUT_DIM)
    assert px[1].shape == (B, INPUT_DIM)
    assert x_samp.shape == (B, INPUT_DIM)
    assert mu.shape == (B, LATENT_DIM)
    assert logvar.shape == (B, LATENT_DIM)

    x_mu_r, x_lv_r, x_samp_r, mu_r, lv_r = _reference_forward(
        params, x, label, eps_z, eps_x)
    assert jnp.allclose(px[0], x_mu_r, atol=2e-3, rtol=2e-3)
    assert jnp.allclose(px[1], x_lv_r, atol=2e-3, rtol=2e-3)
    assert jnp.allclose(x_samp, x_samp_r, atol=2e-3, rtol=2e-3)
    assert jnp.allclose(mu, mu_r, atol=2e-3, rtol=2e-3)
    assert jnp.allclose(logvar, lv_r, atol=2e-3, rtol=2e-3)

    print("KERNEL_OK")
</pallas_src>

<mosaic_0001>
module attributes {stable_mosaic.version = 11 : i64} {
  func.func @vae_mlp_kernel(%arg0: i32, %arg1: memref<8x192xf32, #tpu.memory_space<vmem>>, %arg2: memref<64x32xf32, #tpu.memory_space<vmem>>, %arg3: memref<1x32xf32, #tpu.memory_space<vmem>>, %arg4: memref<32x192xf32, #tpu.memory_space<vmem>>, %arg5: memref<1x192xf32, #tpu.memory_space<vmem>>, %arg6: memref<64x32xf32, #tpu.memory_space<vmem>>, %arg7: memref<1x32xf32, #tpu.memory_space<vmem>>, %arg8: memref<32x128xf32, #tpu.memory_space<vmem>>, %arg9: memref<1x128xf32, #tpu.memory_space<vmem>>, %arg10: memref<8x256xf32, #tpu.memory_space<vmem>>) attributes {dimension_semantics = [#tpu.dimension_semantics<parallel>], iteration_bounds = array<i64: 1>, scalar_prefetch = 0 : i64, scratch_operands = 0 : i64, tpu.core_type = #tpu.core_type<tc>, window_params = [{transform_indices = @transform_0, window_bounds = array<i64: 8, 192>}, {pipeline_mode = #tpu.pipeline_mode<synchronous>, transform_indices = @transform_1, window_bounds = array<i64: 64, 32>}, {pipeline_mode = #tpu.pipeline_mode<synchronous>, transform_indices = @transform_2, window_bounds = array<i64: 1, 32>}, {pipeline_mode = #tpu.pipeline_mode<synchronous>, transform_indices = @transform_3, window_bounds = array<i64: 32, 192>}, {pipeline_mode = #tpu.pipeline_mode<synchronous>, transform_indices = @transform_4, window_bounds = array<i64: 1, 192>}, {pipeline_mode = #tpu.pipeline_mode<synchronous>, transform_indices = @transform_5, window_bounds = array<i64: 64, 32>}, {pipeline_mode = #tpu.pipeline_mode<synchronous>, transform_indices = @transform_6, window_bounds = array<i64: 1, 32>}, {pipeline_mode = #tpu.pipeline_mode<synchronous>, transform_indices = @transform_7, window_bounds = array<i64: 32, 128>}, {pipeline_mode = #tpu.pipeline_mode<synchronous>, transform_indices = @transform_8, window_bounds = array<i64: 1, 128>}, {transform_indices = @transform_9, window_bounds = array<i64: 8, 256>}]} {
    %c0 = arith.constant 0 : index
    %c0_0 = arith.constant 0 : index
    %0 = vector.load %arg1[%c0, %c0_0] : memref<8x192xf32, #tpu.memory_space<vmem>>, vector<8x64xf32>
    %c0_1 = arith.constant 0 : index
    %c64 = arith.constant 64 : index
    %1 = vector.load %arg1[%c0_1, %c64] : memref<8x192xf32, #tpu.memory_space<vmem>>, vector<8x64xf32>
    %c0_2 = arith.constant 0 : index
    %c128 = arith.constant 128 : index
    %2 = vector.load %arg1[%c0_2, %c128] : memref<8x192xf32, #tpu.memory_space<vmem>>, vector<8x64xf32>
    %c0_3 = arith.constant 0 : index
    %c0_4 = arith.constant 0 : index
    %3 = vector.load %arg2[%c0_3, %c0_4] : memref<64x32xf32, #tpu.memory_space<vmem>>, vector<64x32xf32>
    %cst = arith.constant dense<0.000000e+00> : vector<8x32xf32>
    %4 = tpu.matmul %0, %3, %cst {dimension_numbers = #tpu.dot_dimension_numbers<[1], [0], [0], [1], [0, 0, 1, 1], [], []>} : vector<8x64xf32>, vector<64x32xf32>, vector<8x32xf32> -> vector<8x32xf32>
    %c0_5 = arith.constant 0 : index
    %c0_6 = arith.constant 0 : index
    %5 = vector.load %arg3[%c0_5, %c0_6] : memref<1x32xf32, #tpu.memory_space<vmem>>, vector<1x32xf32>
    %6 = vector.broadcast %5 : vector<1x32xf32> to vector<8x32xf32>
    %7 = arith.addf %4, %6 : vector<8x32xf32>
    %8 = math.tanh %7 : vector<8x32xf32>
    %c0_7 = arith.constant 0 : index
    %c0_8 = arith.constant 0 : index
    %9 = vector.load %arg4[%c0_7, %c0_8] : memref<32x192xf32, #tpu.memory_space<vmem>>, vector<32x192xf32>
    %cst_9 = arith.constant dense<0.000000e+00> : vector<8x192xf32>
    %10 = tpu.matmul %8, %9, %cst_9 {dimension_numbers = #tpu.dot_dimension_numbers<[1], [0], [0], [1], [0, 0, 1, 1], [], []>} : vector<8x32xf32>, vector<32x192xf32>, vector<8x192xf32> -> vector<8x192xf32>
    %c0_10 = arith.constant 0 : index
    %c0_11 = arith.constant 0 : index
    %11 = vector.load %arg5[%c0_10, %c0_11] : memref<1x192xf32, #tpu.memory_space<vmem>>, vector<1x192xf32>
    %12 = vector.broadcast %11 : vector<1x192xf32> to vector<8x192xf32>
    %13 = arith.addf %10, %12 : vector<8x192xf32>
    %14 = vector.extract_strided_slice %13 {offsets = [0, 0], sizes = [8, 64], strides = [1, 1]} : vector<8x192xf32> to vector<8x64xf32>
    %15 = vector.extract_strided_slice %13 {offsets = [0, 64], sizes = [8, 64], strides = [1, 1]} : vector<8x192xf32> to vector<8x64xf32>
    %cst_12 = arith.constant 5.000000e-01 : f32
    %16 = vector.broadcast %cst_12 : f32 to vector<8x64xf32>
    %17 = arith.mulf %16, %15 : vector<8x64xf32>
    %18 = math.exp %17 : vector<8x64xf32>
    %19 = arith.mulf %18, %1 : vector<8x64xf32>
    %20 = arith.addf %14, %19 : vector<8x64xf32>
    %c0_13 = arith.constant 0 : index
    %c0_14 = arith.constant 0 : index
    %21 = vector.load %arg6[%c0_13, %c0_14] : memref<64x32xf32, #tpu.memory_space<vmem>>, vector<64x32xf32>
    %cst_15 = arith.constant dense<0.000000e+00> : vector<8x32xf32>
    %22 = tpu.matmul %20, %21, %cst_15 {dimension_numbers = #tpu.dot_dimension_numbers<[1], [0], [0], [1], [0, 0, 1, 1], [], []>} : vector<8x64xf32>, vector<64x32xf32>, vector<8x32xf32> -> vector<8x32xf32>
    %c0_16 = arith.constant 0 : index
    %c0_17 = arith.constant 0 : index
    %23 = vector.load %arg7[%c0_16, %c0_17] : memref<1x32xf32, #tpu.memory_space<vmem>>, vector<1x32xf32>
    %24 = vector.broadcast %23 : vector<1x32xf32> to vector<8x32xf32>
    %25 = arith.addf %22, %24 : vector<8x32xf32>
    %26 = math.tanh %25 : vector<8x32xf32>
    %c0_18 = arith.constant 0 : index
    %c0_19 = arith.constant 0 : index
    %27 = vector.load %arg8[%c0_18, %c0_19] : memref<32x128xf32, #tpu.memory_space<vmem>>, vector<32x128xf32>
    %cst_20 = arith.constant dense<0.000000e+00> : vector<8x128xf32>
    %28 = tpu.matmul %26, %27, %cst_20 {dimension_numbers = #tpu.dot_dimension_numbers<[1], [0], [0], [1], [0, 0, 1, 1], [], []>} : vector<8x32xf32>, vector<32x128xf32>, vector<8x128xf32> -> vector<8x128xf32>
    %c0_21 = arith.constant 0 : index
    %c0_22 = arith.constant 0 : index
    %29 = vector.load %arg9[%c0_21, %c0_22] : memref<1x128xf32, #tpu.memory_space<vmem>>, vector<1x128xf32>
    %30 = vector.broadcast %29 : vector<1x128xf32> to vector<8x128xf32>
    %31 = arith.addf %28, %30 : vector<8x128xf32>
    %32 = vector.extract_strided_slice %31 {offsets = [0, 0], sizes = [8, 64], strides = [1, 1]} : vector<8x128xf32> to vector<8x64xf32>
    %33 = vector.extract_strided_slice %31 {offsets = [0, 64], sizes = [8, 64], strides = [1, 1]} : vector<8x128xf32> to vector<8x64xf32>
    %cst_23 = arith.constant 5.000000e-01 : f32
    %34 = vector.broadcast %cst_23 : f32 to vector<8x64xf32>
    %35 = arith.mulf %34, %33 : vector<8x64xf32>
    %36 = math.exp %35 : vector<8x64xf32>
    %37 = arith.mulf %36, %2 : vector<8x64xf32>
    %38 = arith.addf %32, %37 : vector<8x64xf32>
    %c0_24 = arith.constant 0 : index
    %c0_25 = arith.constant 0 : index
    %39 = vector.load %arg10[%c0_24, %c0_25] : memref<8x256xf32, #tpu.memory_space<vmem>>, vector<8x128xf32>
    tpu.vector_store %arg10[%c0_24, %c0_25], %31 {strides = array<i32>} : memref<8x256xf32, #tpu.memory_space<vmem>>, vector<8x128xf32>,
    %c0_26 = arith.constant 0 : index
    %c128_27 = arith.constant 128 : index
    %40 = vector.load %arg10[%c0_26, %c128_27] : memref<8x256xf32, #tpu.memory_space<vmem>>, vector<8x64xf32>
    tpu.vector_store %arg10[%c0_26, %c128_27], %38 {strides = array<i32>} : memref<8x256xf32, #tpu.memory_space<vmem>>, vector<8x64xf32>,
    %41 = vector.extract_strided_slice %13 {offsets = [0, 128], sizes = [8, 64], strides = [1, 1]} : vector<8x192xf32> to vector<8x64xf32>
    %c0_28 = arith.constant 0 : index
    %c192 = arith.constant 192 : index
    %42 = vector.load %arg10[%c0_28, %c192] : memref<8x256xf32, #tpu.memory_space<vmem>>, vector<8x64xf32>
    tpu.vector_store %arg10[%c0_28, %c192], %41 {strides = array<i32>} : memref<8x256xf32, #tpu.memory_space<vmem>>, vector<8x64xf32>,
    return
  }
  func.func @transform_0(%arg0: i32) -> (i32, i32) {
    %c0_i32 = arith.constant 0 : i32
    %c0_i32_0 = arith.constant 0 : i32
    return %arg0, %c0_i32 : i32, i32
  }
  func.func @transform_1(%arg0: i32) -> (i32, i32) {
    %c0_i32 = arith.constant 0 : i32
    %c0_i32_0 = arith.constant 0 : i32
    %c0_i32_1 = arith.constant 0 : i32
    return %c0_i32, %c0_i32_0 : i32, i32
  }
  func.func @transform_2(%arg0: i32) -> (i32, i32) {
    %c0_i32 = arith.constant 0 : i32
    %c0_i32_0 = arith.constant 0 : i32
    %c0_i32_1 = arith.constant 0 : i32
    return %c0_i32, %c0_i32_0 : i32, i32
  }
  func.func @transform_3(%arg0: i32) -> (i32, i32) {
    %c0_i32 = arith.constant 0 : i32
    %c0_i32_0 = arith.constant 0 : i32
    %c0_i32_1 = arith.constant 0 : i32
    return %c0_i32, %c0_i32_0 : i32, i32
  }
  func.func @transform_4(%arg0: i32) -> (i32, i32) {
    %c0_i32 = arith.constant 0 : i32
    %c0_i32_0 = arith.constant 0 : i32
    %c0_i32_1 = arith.constant 0 : i32
    return %c0_i32, %c0_i32_0 : i32, i32
  }
  func.func @transform_5(%arg0: i32) -> (i32, i32) {
    %c0_i32 = arith.constant 0 : i32
    %c0_i32_0 = arith.constant 0 : i32
    %c0_i32_1 = arith.constant 0 : i32
    return %c0_i32, %c0_i32_0 : i32, i32
  }
  func.func @transform_6(%arg0: i32) -> (i32, i32) {
    %c0_i32 = arith.constant 0 : i32
    %c0_i32_0 = arith.constant 0 : i32
    %c0_i32_1 = arith.constant 0 : i32
    return %c0_i32, %c0_i32_0 : i32, i32
  }
  func.func @transform_7(%arg0: i32) -> (i32, i32) {
    %c0_i32 = arith.constant 0 : i32
    %c0_i32_0 = arith.constant 0 : i32
    %c0_i32_1 = arith.constant 0 : i32
    return %c0_i32, %c0_i32_0 : i32, i32
  }
  func.func @transform_8(%arg0: i32) -> (i32, i32) {
    %c0_i32 = arith.constant 0 : i32
    %c0_i32_0 = arith.constant 0 : i32
    %c0_i32_1 = arith.constant 0 : i32
    return %c0_i32, %c0_i32_0 : i32, i32
  }
  func.func @transform_9(%arg0: i32) -> (i32, i32) {
    %c0_i32 = arith.constant 0 : i32
    %c0_i32_0 = arith.constant 0 : i32
    return %arg0, %c0_i32 : i32, i32
  }
}

</mosaic_0001>

<llo_original>
// kernel: tpu_custom_call.1
$region0: #{tpu_custom_call.1}
  #allocation0 [shape = 'u32[]', space=smem, size = 0x4, offset = 0x4, fixed_abs, tag = 'smem constant byte address 0x4 - core index']
  #allocation1 [shape = 'u32[144,128]{1,0:T(1,128)}', space=vmem, size = 0x12000, scoped, tag = 'internal scratch']
  %s0 = inlined_call_operand.vmem [shape: f32[8,192], index: 0, kind: input, shape index: {}]
  %s1 = inlined_call_operand.vmem [shape: f32[64,32], index: 1, kind: input, shape index: {}]
  %s2 = inlined_call_operand.vmem [shape: f32[1,32], index: 2, kind: input, shape index: {}]
  %s3 = inlined_call_operand.vmem [shape: f32[32,192], index: 3, kind: input, shape index: {}]
  %s4 = inlined_call_operand.vmem [shape: f32[1,192], index: 4, kind: input, shape index: {}]
  %s5 = inlined_call_operand.vmem [shape: f32[64,32], index: 5, kind: input, shape index: {}]
  %s6 = inlined_call_operand.vmem [shape: f32[1,32], index: 6, kind: input, shape index: {}]
  %s7 = inlined_call_operand.vmem [shape: f32[32,128], index: 7, kind: input, shape index: {}]
  %s8 = inlined_call_operand.vmem [shape: f32[1,128], index: 8, kind: input, shape index: {}]
  %s9 = inlined_call_operand.hbm [shape: f32[8,256], index: 9, kind: output, shape index: {}]
  %s10 = sld [smem:[#allocation0]]
  $region46: #{tpu_custom_call.1} parent=0
    _
  %s12 = ssub.s32 1, %s10
  %s13 = scalar_select 0, %s12, %s10
  $region1: #{tpu_custom_call.1} parent=0
    #allocation2 [shape = 'u8[8192]{0}', space=vmem, size = 0x2000, scoped, tag = 'output window, operand 0, single buffered']
    #allocation3 [shape = 's32[1]{0}', space=sflag, size = 0x4, scoped, tag = 'scoped memory for tpu_custom_call.1']
    %14 = vsyncpa [#allocation3], 0
    // Predicated region
    $region2: #{tpu_custom_call.1} parent=1 // pred_check
      _
    $region3: #{tpu_custom_call.1} parent=1 // pred_check_branch
      %16 = sbr.rel (0) target = $region5
    $region4: #{tpu_custom_call.1} parent=1 // pred_region
      _
    $region5: #{tpu_custom_call.1} parent=1 // pred_fallthru
      _
    // Predicated region
    $region6: #{tpu_custom_call.1} parent=1 // pred_check
      _
    $region7: #{tpu_custom_call.1} parent=1 // pred_check_branch
      %18 = sbr.rel (0) target = $region9
    $region8: #{tpu_custom_call.1} parent=1 // pred_region
      _
    $region9: #{tpu_custom_call.1} parent=1 // pred_fallthru
      _
    // Predicated region
    $region10: #{tpu_custom_call.1} parent=1 // pred_check
      _
    $region11: #{tpu_custom_call.1} parent=1 // pred_check_branch
      %20 = sbr.rel (0) target = $region13
    $region12: #{tpu_custom_call.1} parent=1 // pred_region
      _
    $region13: #{tpu_custom_call.1} parent=1 // pred_fallthru
      _
    // Predicated region
    $region14: #{tpu_custom_call.1} parent=1 // pred_check
      _
    $region15: #{tpu_custom_call.1} parent=1 // pred_check_branch
      %22 = sbr.rel (0) target = $region17
    $region16: #{tpu_custom_call.1} parent=1 // pred_region
      _
    $region17: #{tpu_custom_call.1} parent=1 // pred_fallthru
      _
    // Predicated region
    $region18: #{tpu_custom_call.1} parent=1 // pred_check
      _
    $region19: #{tpu_custom_call.1} parent=1 // pred_check_branch
      %24 = sbr.rel (0) target = $region21
    $region20: #{tpu_custom_call.1} parent=1 // pred_region
      _
    $region21: #{tpu_custom_call.1} parent=1 // pred_fallthru
      _
    // Predicated region
    $region22: #{tpu_custom_call.1} parent=1 // pred_check
      _
    $region23: #{tpu_custom_call.1} parent=1 // pred_check_branch
      %26 = sbr.rel (0) target = $region25
    $region24: #{tpu_custom_call.1} parent=1 // pred_region
      _
    $region25: #{tpu_custom_call.1} parent=1 // pred_fallthru
      _
    // Predicated region
    $region26: #{tpu_custom_call.1} parent=1 // pred_check
      _
    $region27: #{tpu_custom_call.1} parent=1 // pred_check_branch
      %28 = sbr.rel (0) target = $region29
    $region28: #{tpu_custom_call.1} parent=1 // pred_region
      _
    $region29: #{tpu_custom_call.1} parent=1 // pred_fallthru
      _
    // Predicated region
    $region30: #{tpu_custom_call.1} parent=1 // pred_check
      _
    $region31: #{tpu_custom_call.1} parent=1 // pred_check_branch
      %30 = sbr.rel (0) target = $region33
    $region32: #{tpu_custom_call.1} parent=1 // pred_region
      _
    $region33: #{tpu_custom_call.1} parent=1 // pred_fallthru
      _
    // Predicated region
    $region34: #{tpu_custom_call.1} parent=1 // pred_check
      _
    $region35: #{tpu_custom_call.1} parent=1 // pred_check_branch
      %32 = sbr.rel (0) target = $region37
    $region36: #{tpu_custom_call.1} parent=1 // pred_region
      _
    $region37: #{tpu_custom_call.1} parent=1 // pred_fallthru
      _
    %v33 = vld [vmem:[%s0] sm:$0xff]
    %v34 = vld [vmem:[%s0 + $0x8] sm:$0xff]
    %v35 = vld [vmem:[%s1] sm:$0xff]
    %v36 = vld [vmem:[%s1 + $0x8] sm:$0xff]
    %v37 = vld [vmem:[%s1 + $0x10] sm:$0xff]
    %v38 = vld [vmem:[%s1 + $0x18] sm:$0xff]
    %v39 = vld [vmem:[%s1 + $0x20] sm:$0xff]
    %v40 = vld [vmem:[%s1 + $0x28] sm:$0xff]
    %v41 = vld [vmem:[%s1 + $0x30] sm:$0xff]
    %v42 = vld [vmem:[%s1 + $0x38] sm:$0xff]
    %v43 = vld [vmem:[%s2] sm:$0x1]
    %v45 = vlaneseq
    %v46 = vshrl.u32 %v45, 7
    %v47 = vsub.s32 0, %v46
    %v48 = vrot.slane %v43, %v47
    %vm50 = vcmask 523264
    %v52 = vsel %vm50, %v33, 0
    %54 = vmatprep.subr.mxu0 0.0
    %55 = vmatpush1.msra.mxu0 %v35
    %56 = vmatprep.subr.mxu0 0.0
    %57 = vmatpush1.msra.mxu0 %v36
    %58 = vmatprep.subr.mxu0 0.0
    %59 = vmatpush1.msra.mxu0 %v37
    %60 = vmatprep.subr.mxu0 0.0
    %61 = vmatpush1.msra.mxu0 %v38
    %62 = vmatprep.subr.mxu0 0.0
    %63 = vmatpush1.msra.mxu0 %v39
    %64 = vmatprep.subr.mxu0 0.0
    %65 = vmatpush1.msra.mxu0 %v40
    %66 = vmatprep.subr.mxu0 0.0
    %67 = vmatpush1.msra.mxu0 %v41
    %68 = vmatprep.subr.mxu0 0.0
    %69 = vmatpush1.msra.mxu0 %v42
    %70 = vmatprep.subr.mxu0 0.0
    %71 = vmatpush1.msra.mxu0 0.0
    %72 = vmatprep.subr.mxu0 0.0
    %73 = vmatpush1.msra.mxu0 0.0
    %74 = vmatprep.subr.mxu0 0.0
    %75 = vmatpush1.msra.mxu0 0.0
    %76 = vmatprep.subr.mxu0 0.0
    %77 = vmatpush1.msra.mxu0 0.0
    %78 = vmatprep.subr.mxu0 0.0
    %79 = vmatpush1.msra.mxu0 0.0
    %80 = vmatprep.subr.mxu0 0.0
    %81 = vmatpush1.msra.mxu0 0.0
    %82 = vmatprep.subr.mxu0 0.0
    %83 = vmatpush1.msra.mxu0 0.0
    %84 = vmatprep.subr.mxu0 0.0
    %85 = vmatpush1.msra.mxu0 0.0
    %86 = vmatprep.subr.mxu0 0.0
    %87 = vmatpush1.msra.mxu0 0.0
    %88 = vmatprep.subr.mxu0 0.0
    %89 = vmatpush1.msra.mxu0 0.0
    %90 = vmatprep.subr.mxu0 0.0
    %91 = vmatpush1.msra.mxu0 0.0
    %92 = vmatprep.subr.mxu0 0.0
    %93 = vmatpush1.msra.mxu0 0.0
    %94 = vmatprep.subr.mxu0 0.0
    %95 = vmatpush1.msra.mxu0 0.0
    %96 = vmatprep.subr.mxu0 0.0
    %97 = vmatpush1.msra.mxu0 0.0
    %98 = vmatprep.subr.mxu0 0.0
    %99 = vmatpush1.msra.mxu0 0.0
    %100 = vmatprep.subr.mxu0 0.0
    %101 = vmatpush1.msra.mxu0 0.0
    %102 = vmatprep.subr.mxu0 0.0
    %103 = vmatpush1.msra.mxu0 0.0
    %104 = vmatprep.subr.mxu0 0.0
    %105 = vmatpush1.msra.mxu0 0.0
    %106 = vmatprep.subr.mxu0 0.0
    %107 = vmatpush1.msra.mxu0 0.0
    %108 = vmatprep.subr.mxu0 0.0
    %109 = vmatpush1.msra.mxu0 0.0
    %110 = vmatprep.subr.mxu0 0.0
    %111 = vmatpush1.msra.mxu0 0.0
    %112 = vmatprep.subr.mxu0 0.0
    %113 = vmatpush1.msra.mxu0 0.0
    %114 = vmatprep.subr.mxu0 0.0
    %115 = vmatpush1.msra.mxu0 0.0
    %116 = vmatprep.subr.mxu0 0.0
    %117 = vmatpush1.msra.mxu0 0.0
    %118 = vmatprep.mubr.f32.mxu0 0.0
    %119 = vmatmul.mubr.f32.gmra.mrb[0].mxu0 %v52
    %v120 = vpop.f32.mrb[0].mxu0
    %v121 = vadd.f32 %v48, %v120
    %v122 = vpop.f32.mrb[0].mxu0
    %123 = vdwg.mxu0
    %v124 = vtanh.pop %v121
    %v125 = vld [vmem:[%s3] sm:$0xff]
    %v126 = vld [vmem:[%s3 + $0x8] sm:$0xff]
    %v127 = vld [vmem:[%s3 + $0x10] sm:$0xff]
    %v128 = vld [vmem:[%s3 + $0x18] sm:$0xff]
    %v129 = vld [vmem:[%s3 + $0x20] sm:$0xff]
    %v130 = vld [vmem:[%s3 + $0x28] sm:$0xff]
    %v131 = vld [vmem:[%s3 + $0x30] sm:$0xff]
    %v132 = vld [vmem:[%s3 + $0x38] sm:$0xff]
    %v133 = vld [vmem:[%s4] sm:$0x3]
    %v135 = vlaneseq
    %v136 = vshrl.u32 %v135, 7
    %v137 = vsub.s32 0, %v136
    %v138 = vrot.slane %v133, %v137
    %v139 = vlaneseq
    %v140 = vshrl.u32 %v139, 7
    %v141 = vsub.s32 1, %v140
    %v142 = vrot.slane %v133, %v141
    %vm145 = vcmask 261120
    %v147 = vsel %vm145, %v124, 0
    %149 = vmatprep.subr.mxu0 %v126
    %150 = vmatpush1.msra.mxu0 %v125
    %151 = vmatprep.subr.mxu0 %v128
    %152 = vmatpush1.msra.mxu0 %v127
    %153 = vmatprep.subr.mxu0 %v130
    %154 = vmatpush1.msra.mxu0 %v129
    %155 = vmatprep.subr.mxu0 %v132
    %156 = vmatpush1.msra.mxu0 %v131
    %157 = vmatprep.subr.mxu0 0.0
    %158 = vmatpush1.msra.mxu0 0.0
    %159 = vmatprep.subr.mxu0 0.0
    %160 = vmatpush1.msra.mxu0 0.0
    %161 = vmatprep.subr.mxu0 0.0
    %162 = vmatpush1.msra.mxu0 0.0
    %163 = vmatprep.subr.mxu0 0.0
    %164 = vmatpush1.msra.mxu0 0.0
    %165 = vmatprep.subr.mxu0 0.0
    %166 = vmatpush1.msra.mxu0 0.0
    %167 = vmatprep.subr.mxu0 0.0
    %168 = vmatpush1.msra.mxu0 0.0
    %169 = vmatprep.subr.mxu0 0.0
    %170 = vmatpush1.msra.mxu0 0.0
    %171 = vmatprep.subr.mxu0 0.0
    %172 = vmatpush1.msra.mxu0 0.0
    %173 = vmatprep.subr.mxu0 0.0
    %174 = vmatpush1.msra.mxu0 0.0
    %175 = vmatprep.subr.mxu0 0.0
    %176 = vmatpush1.msra.mxu0 0.0
    %177 = vmatprep.subr.mxu0 0.0
    %178 = vmatpush1.msra.mxu0 0.0
    %179 = vmatprep.subr.mxu0 0.0
    %180 = vmatpush1.msra.mxu0 0.0
    %181 = vmatprep.subr.mxu0 0.0
    %182 = vmatpush1.msra.mxu0 0.0
    %183 = vmatprep.subr.mxu0 0.0
    %184 = vmatpush1.msra.mxu0 0.0
    %185 = vmatprep.subr.mxu0 0.0
    %186 = vmatpush1.msra.mxu0 0.0
    %187 = vmatprep.subr.mxu0 0.0
    %188 = vmatpush1.msra.mxu0 0.0
    %189 = vmatprep.subr.mxu0 0.0
    %190 = vmatpush1.msra.mxu0 0.0
    %191 = vmatprep.subr.mxu0 0.0
    %192 = vmatpush1.msra.mxu0 0.0
    %193 = vmatprep.subr.mxu0 0.0
    %194 = vmatpush1.msra.mxu0 0.0
    %195 = vmatprep.subr.mxu0 0.0
    %196 = vmatpush1.msra.mxu0 0.0
    %197 = vmatprep.subr.mxu0 0.0
    %198 = vmatpush1.msra.mxu0 0.0
    %199 = vmatprep.subr.mxu0 0.0
    %200 = vmatpush1.msra.mxu0 0.0
    %201 = vmatprep.subr.mxu0 0.0
    %202 = vmatpush1.msra.mxu0 0.0
    %203 = vmatprep.subr.mxu0 0.0
    %204 = vmatpush1.msra.mxu0 0.0
    %205 = vmatprep.subr.mxu0 0.0
    %206 = vmatpush1.msra.mxu0 0.0
    %207 = vmatprep.subr.mxu0 0.0
    %208 = vmatpush1.msra.mxu0 0.0
    %209 = vmatprep.subr.mxu0 0.0
    %210 = vmatpush1.msra.mxu0 0.0
    %211 = vmatprep.subr.mxu0 0.0
    %212 = vmatpush1.msra.mxu0 0.0
    %213 = vmatprep.mubr.f32.mxu0 0.0
    %214 = vmatmul.mubr.f32.gmra.mrb[0].mxu0 %v147
    %v215 = vpop.f32.mrb[0].mxu0
    %v216 = vadd.f32 %v138, %v215
    %v217 = vpop.f32.mrb[0].mxu0
    %v218 = vadd.f32 %v142, %v217
    %219 = vdwg.mxu0
    %v220 = vmul.f32 %v216, 0.5
    %v221 = vmul.f32 %v220, 1.442695
    %v222 = vpow.pop %v221
    %v223 = vmul.f32 %v222, %v33
    %225 = vrot.lane.b32.xlu0 %v223, 64
    %v226 = vpop.permute.xlu0 %225
    %v228 = vadd.f32 %v216, %v226
    %v229 = vld [vmem:[%s5] sm:$0xff]
    %v230 = vld [vmem:[%s5 + $0x8] sm:$0xff]
    %v231 = vld [vmem:[%s5 + $0x10] sm:$0xff]
    %v232 = vld [vmem:[%s5 + $0x18] sm:$0xff]
    %v233 = vld [vmem:[%s5 + $0x20] sm:$0xff]
    %v234 = vld [vmem:[%s5 + $0x28] sm:$0xff]
    %v235 = vld [vmem:[%s5 + $0x30] sm:$0xff]
    %v236 = vld [vmem:[%s5 + $0x38] sm:$0xff]
    %v237 = vld [vmem:[%s6] sm:$0x1]
    %v239 = vlaneseq
    %v240 = vshrl.u32 %v239, 7
    %v241 = vsub.s32 0, %v240
    %v242 = vrot.slane %v237, %v241
    %v245 = vsel %vm50, %v228, 0
    %247 = vmatprep.subr.mxu0 0.0
    %248 = vmatpush1.msra.mxu0 %v229
    %249 = vmatprep.subr.mxu0 0.0
    %250 = vmatpush1.msra.mxu0 %v230
    %251 = vmatprep.subr.mxu0 0.0
    %252 = vmatpush1.msra.mxu0 %v231
    %253 = vmatprep.subr.mxu0 0.0
    %254 = vmatpush1.msra.mxu0 %v232
    %255 = vmatprep.subr.mxu0 0.0
    %256 = vmatpush1.msra.mxu0 %v233
    %257 = vmatprep.subr.mxu0 0.0
    %258 = vmatpush1.msra.mxu0 %v234
    %259 = vmatprep.subr.mxu0 0.0
    %260 = vmatpush1.msra.mxu0 %v235
    %261 = vmatprep.subr.mxu0 0.0
    %262 = vmatpush1.msra.mxu0 %v236
    %263 = vmatprep.subr.mxu0 0.0
    %264 = vmatpush1.msra.mxu0 0.0
    %265 = vmatprep.subr.mxu0 0.0
    %266 = vmatpush1.msra.mxu0 0.0
    %267 = vmatprep.subr.mxu0 0.0
    %268 = vmatpush1.msra.mxu0 0.0
    %269 = vmatprep.subr.mxu0 0.0
    %270 = vmatpush1.msra.mxu0 0.0
    %271 = vmatprep.subr.mxu0 0.0
    %272 = vmatpush1.msra.mxu0 0.0
    %273 = vmatprep.subr.mxu0 0.0
    %274 = vmatpush1.msra.mxu0 0.0
    %275 = vmatprep.subr.mxu0 0.0
    %276 = vmatpush1.msra.mxu0 0.0
    %277 = vmatprep.subr.mxu0 0.0
    %278 = vmatpush1.msra.mxu0 0.0
    %279 = vmatprep.subr.mxu0 0.0
    %280 = vmatpush1.msra.mxu0 0.0
    %281 = vmatprep.subr.mxu0 0.0
    %282 = vmatpush1.msra.mxu0 0.0
    %283 = vmatprep.subr.mxu0 0.0
    %284 = vmatpush1.msra.mxu0 0.0
    %285 = vmatprep.subr.mxu0 0.0
    %286 = vmatpush1.msra.mxu0 0.0
    %287 = vmatprep.subr.mxu0 0.0
    %288 = vmatpush1.msra.mxu0 0.0
    %289 = vmatprep.subr.mxu0 0.0
    %290 = vmatpush1.msra.mxu0 0.0
    %291 = vmatprep.subr.mxu0 0.0
    %292 = vmatpush1.msra.mxu0 0.0
    %293 = vmatprep.subr.mxu0 0.0
    %294 = vmatpush1.msra.mxu0 0.0
    %295 = vmatprep.subr.mxu0 0.0
    %296 = vmatpush1.msra.mxu0 0.0
    %297 = vmatprep.subr.mxu0 0.0
    %298 = vmatpush1.msra.mxu0 0.0
    %299 = vmatprep.subr.mxu0 0.0
    %300 = vmatpush1.msra.mxu0 0.0
    %301 = vmatprep.subr.mxu0 0.0
    %302 = vmatpush1.msra.mxu0 0.0
    %303 = vmatprep.subr.mxu0 0.0
    %304 = vmatpush1.msra.mxu0 0.0
    %305 = vmatprep.subr.mxu0 0.0
    %306 = vmatpush1.msra.mxu0 0.0
    %307 = vmatprep.subr.mxu0 0.0
    %308 = vmatpush1.msra.mxu0 0.0
    %309 = vmatprep.subr.mxu0 0.0
    %310 = vmatpush1.msra.mxu0 0.0
    %311 = vmatprep.mubr.f32.mxu0 0.0
    %312 = vmatmul.mubr.f32.gmra.mrb[0].mxu0 %v245
    %v313 = vpop.f32.mrb[0].mxu0
    %v314 = vadd.f32 %v242, %v313
    %v315 = vpop.f32.mrb[0].mxu0
    %316 = vdwg.mxu0
    %v317 = vtanh.pop %v314
    %v318 = vld [vmem:[%s7] sm:$0xff]
    %v319 = vld [vmem:[%s7 + $0x8] sm:$0xff]
    %v320 = vld [vmem:[%s7 + $0x10] sm:$0xff]
    %v321 = vld [vmem:[%s7 + $0x18] sm:$0xff]
    %v322 = vld [vmem:[%s8] sm:$0x1]
    %v324 = vlaneseq
    %v325 = vshrl.u32 %v324, 7
    %v326 = vsub.s32 0, %v325
    %v327 = vrot.slane %v322, %v326
    %v330 = vsel %vm145, %v317, 0
    %332 = vmatprep.subr.mxu0 0.0
    %333 = vmatpush1.msra.mxu0 %v318
    %334 = vmatprep.subr.mxu0 0.0
    %335 = vmatpush1.msra.mxu0 %v319
    %336 = vmatprep.subr.mxu0 0.0
    %337 = vmatpush1.msra.mxu0 %v320
    %338 = vmatprep.subr.mxu0 0.0
    %339 = vmatpush1.msra.mxu0 %v321
    %340 = vmatprep.subr.mxu0 0.0
    %341 = vmatpush1.msra.mxu0 0.0
    %342 = vmatprep.subr.mxu0 0.0
    %343 = vmatpush1.msra.mxu0 0.0
    %344 = vmatprep.subr.mxu0 0.0
    %345 = vmatpush1.msra.mxu0 0.0
    %346 = vmatprep.subr.mxu0 0.0
    %347 = vmatpush1.msra.mxu0 0.0
    %348 = vmatprep.subr.mxu0 0.0
    %349 = vmatpush1.msra.mxu0 0.0
    %350 = vmatprep.subr.mxu0 0.0
    %351 = vmatpush1.msra.mxu0 0.0
    %352 = vmatprep.subr.mxu0 0.0
    %353 = vmatpush1.msra.mxu0 0.0
    %354 = vmatprep.subr.mxu0 0.0
    %355 = vmatpush1.msra.mxu0 0.0
    %356 = vmatprep.subr.mxu0 0.0
    %357 = vmatpush1.msra.mxu0 0.0
    %358 = vmatprep.subr.mxu0 0.0
    %359 = vmatpush1.msra.mxu0 0.0
    %360 = vmatprep.subr.mxu0 0.0
    %361 = vmatpush1.msra.mxu0 0.0
    %362 = vmatprep.subr.mxu0 0.0
    %363 = vmatpush1.msra.mxu0 0.0
    %364 = vmatprep.subr.mxu0 0.0
    %365 = vmatpush1.msra.mxu0 0.0
    %366 = vmatprep.subr.mxu0 0.0
    %367 = vmatpush1.msra.mxu0 0.0
    %368 = vmatprep.subr.mxu0 0.0
    %369 = vmatpush1.msra.mxu0 0.0
    %370 = vmatprep.subr.mxu0 0.0
    %371 = vmatpush1.msra.mxu0 0.0
    %372 = vmatprep.subr.mxu0 0.0
    %373 = vmatpush1.msra.mxu0 0.0
    %374 = vmatprep.subr.mxu0 0.0
    %375 = vmatpush1.msra.mxu0 0.0
    %376 = vmatprep.subr.mxu0 0.0
    %377 = vmatpush1.msra.mxu0 0.0
    %378 = vmatprep.subr.mxu0 0.0
    %379 = vmatpush1.msra.mxu0 0.0
    %380 = vmatprep.subr.mxu0 0.0
    %381 = vmatpush1.msra.mxu0 0.0
    %382 = vmatprep.subr.mxu0 0.0
    %383 = vmatpush1.msra.mxu0 0.0
    %384 = vmatprep.subr.mxu0 0.0
    %385 = vmatpush1.msra.mxu0 0.0
    %386 = vmatprep.subr.mxu0 0.0
    %387 = vmatpush1.msra.mxu0 0.0
    %388 = vmatprep.subr.mxu0 0.0
    %389 = vmatpush1.msra.mxu0 0.0
    %390 = vmatprep.subr.mxu0 0.0
    %391 = vmatpush1.msra.mxu0 0.0
    %392 = vmatprep.subr.mxu0 0.0
    %393 = vmatpush1.msra.mxu0 0.0
    %394 = vmatprep.subr.mxu0 0.0
    %395 = vmatpush1.msra.mxu0 0.0
    %396 = vmatprep.mubr.f32.mxu0 0.0
    %397 = vmatmul.mubr.f32.gmra.mrb[0].mxu0 %v330
    %v398 = vpop.f32.mrb[0].mxu0
    %v399 = vadd.f32 %v327, %v398
    %v400 = vpop.f32.mrb[0].mxu0
    %401 = vdwg.mxu0
    %v402 = vmul.f32 %v399, 0.5
    %v403 = vmul.f32 %v402, 1.442695
    %v404 = vpow.pop %v403
    %406 = vrot.lane.b32.xlu0 %v34, 64
    %v407 = vpop.permute.xlu0 %406
    %v409 = vmul.f32 %v404, %v407
    %411 = vrot.lane.b32.xlu0 %v409, 64
    %v412 = vpop.permute.xlu0 %411
    %v414 = vadd.f32 %v399, %v412
    %415 = vst [vmem:[#allocation2] sm:$0xff] %v399
    %416 = vst.msk [vmem:[#allocation2 + $0x8] sm:$0xff] %vm50, %v414
    %418 = vrot.lane.b32.xlu0 %v218, 64
    %v419 = vpop.permute.xlu0 %418
    %vm421 = vcmask 1048064
    %422 = vst.msk [vmem:[#allocation2 + $0x8] sm:$0xff] %vm421, %v419
    // Predicated region
    $region38: #{tpu_custom_call.1} parent=1 // pred_check
      _
    $region39: #{tpu_custom_call.1} parent=1 // pred_check_branch
      %424 = sbr.rel (0) target = $region41
    $region40: #{tpu_custom_call.1} parent=1 // pred_region
      %s426 = ssub.s32 256, 256
      %427 = vsyncadd [#allocation3], %s426
      %s429 = sshll.u32 [#allocation2], 4
      %s430 = int_to_ptr.vmem [resolvable:$true] %s429
      %432 = dma.vmem_to_hbm [thread:$0]  %s430, 256, %s9, [#allocation3]
    $region41: #{tpu_custom_call.1} parent=1 // pred_fallthru
      _
    // Predicated region
    $region42: #{tpu_custom_call.1} parent=1 // pred_check
      _
    $region43: #{tpu_custom_call.1} parent=1 // pred_check_branch
      %434 = sbr.rel (0) target = $region45
    $region44: #{tpu_custom_call.1} parent=1 // pred_region
      %435 = dma.done [#allocation3], 256
    $region45: #{tpu_custom_call.1} parent=1 // pred_fallthru
      _
    %436 = vsyncpa [#allocation3], 1

</llo_original>
